<compile_context>
chip_gen: v6e
topology: v6e:2x2x1
jax: 0.10.0
libtpu: 0.0.40
codegen_flags: <defaults>
</compile_context>

<pallas_src>
import math

import jax
import jax.numpy as jnp
from jax import lax
from jax.experimental import pallas as pl
from jax.experimental.pallas import tpu as pltpu


_TARGET_BLOCK_BYTES = 2 << 20    # ~2 MiB streamed per block (per perf review)
_VMEM_CAP_BYTES = 56 << 20       # stay under v7x's 64 MiB physical per-TC VMEM


def _round_up(v, m):
    return ((v + m - 1) // m) * m


# ----------------------------------------------------------------------------
# Pallas kernel
# ----------------------------------------------------------------------------
def _bias_norm_kernel(alpha_ref, x_ref, bias_ref, o_ref):
    # alpha_ref: (1,)   f32 in SMEM : exp(-2*log_scale) / C  (folded scalar)
    # x_ref    : (TM, C) input rows tile
    # bias_ref : (1, C)  f32 bias (same resident block every grid step)
    # o_ref    : (TM, C) output tile
    x_in = x_ref[...]                                   # input dtype
    xf = x_in.astype(jnp.float32)                       # f32 accumulate
    d = xf - bias_ref[...]                              # (TM, C)
    ssq = jnp.sum(d * d, axis=-1, keepdims=True)        # (TM, 1) XLU reduce
    scales = lax.rsqrt(ssq * alpha_ref[0])              # EUP rsqrt; == mean^-0.5 * exp(ls)
    # Multiply in the input dtype: avoids a second block-sized f32 temp for bf16 inputs.
    o_ref[...] = (x_in * scales.astype(x_in.dtype)).astype(o_ref.dtype)


# ----------------------------------------------------------------------------
# Tiling / fallback helpers
# ----------------------------------------------------------------------------
def _choose_row_tile(n_rows, c, itemsize):
    """Row tile ~= target block bytes, multiple of 8 sublanes, >= 2 grid steps."""
    if n_rows <= 8:
        return n_rows                                   # full extent (legal block shape)
    tm = max(8, (_TARGET_BLOCK_BYTES // (c * itemsize)) // 8 * 8)
    if n_rows <= tm:
        # Split into at least 2 grid steps so both v7x TensorCores get work.
        tm = max(8, _round_up(-(-n_rows // 2), 8))
    return tm


def _bias_norm_xla(x, bias, log_scale, cd):
    """Plain-XLA fallback for lane-sparse channel counts (C % 128 != 0)."""
    b = bias.reshape((bias.shape[0],) + (1,) * (x.ndim - 1 - cd))
    scales = jnp.mean((x - b) ** 2, axis=cd, keepdims=True) ** (-0.5) * jnp.exp(
        jnp.asarray(log_scale, jnp.float32))
    return (x * scales.astype(x.dtype)).astype(x.dtype)


# ----------------------------------------------------------------------------
# Wrapper
# ----------------------------------------------------------------------------
def bias_norm(x, bias, log_scale, channel_dim=-1):
    """BiasNorm forward.  x: any-rank array; bias: (C,); log_scale: scalar."""
    ndim = x.ndim
    cd = channel_dim % ndim
    C = x.shape[cd]

    # Sub-128 / non-multiple-of-128 channel counts: masked partial stores make the
    # Pallas kernel a loss -> plain XLA.  (Zipformer C=384/512 takes the kernel path.)
    if C % 128 != 0:
        return _bias_norm_xla(x, bias, log_scale, cd)

    xm = jnp.moveaxis(x, cd, -1) if cd != ndim - 1 else x
    lead_shape = xm.shape[:-1]
    N = math.prod(lead_shape) if lead_shape else 1
    x2 = xm.reshape(N, C)

    itemsize = jnp.dtype(x.dtype).itemsize
    TM = _choose_row_tile(N, C, itemsize)
    grid = (pl.cdiv(N, TM),)

    # VMEM budget: double-buffered in/out blocks + in-kernel f32 temps + bias, +30%.
    block_bytes = TM * C * itemsize
    vmem_bytes = int(1.3 * (4 * block_bytes + 2 * TM * C * 4 + 2 * C * 4))
    vmem_bytes = min(max(vmem_bytes, 4 << 20), _VMEM_CAP_BYTES)

    bias2 = bias.astype(jnp.float32).reshape(1, C)      # pre-cast once in the wrapper
    ls = jnp.asarray(log_scale, jnp.float32)
    alpha = (jnp.exp(-2.0 * ls) / jnp.float32(C)).reshape(1)   # folded SMEM scalar

    out2 = pl.pallas_call(
        _bias_norm_kernel,
        out_shape=jax.ShapeDtypeStruct((N, C), x.dtype),
        grid=grid,
        in_specs=[
            pl.BlockSpec(memory_space=pltpu.MemorySpace.SMEM),  # alpha scalar
            pl.BlockSpec((TM, C), lambda i: (i, 0)),            # x rows tile
            pl.BlockSpec((1, C), lambda i: (0, 0)),             # resident bias block
        ],
        out_specs=pl.BlockSpec((TM, C), lambda i: (i, 0)),
        compiler_params=pltpu.CompilerParams(
            dimension_semantics=("parallel",),
            vmem_limit_bytes=vmem_bytes),
        cost_estimate=pl.CostEstimate(
            flops=4 * N * C,
            transcendentals=N,
            bytes_accessed=2 * N * C * itemsize + C * 4),
    )(alpha, x2, bias2)

    out = out2.reshape(lead_shape + (C,))
    if cd != ndim - 1:
        out = jnp.moveaxis(out, -1, cd)
    return out


# ----------------------------------------------------------------------------
# Pure-JAX reference (mirrors BiasNormFunction.forward)
# ----------------------------------------------------------------------------
def reference_bias_norm(x, bias, log_scale, channel_dim=-1):
    cd = channel_dim % x.ndim
    b = bias.reshape((bias.shape[0],) + (1,) * (x.ndim - 1 - cd))
    scales = jnp.mean((x - b) ** 2, axis=cd, keepdims=True) ** (-0.5) * jnp.exp(log_scale)
    return x * scales


# ----------------------------------------------------------------------------
# Main
# ----------------------------------------------------------------------------
if __name__ == "__main__":
    key = jax.random.PRNGKey(0)
    k1, k2, k3, k4, k5, k6 = jax.random.split(key, 6)
    ok = True
    log_scale = jnp.float32(1.0)

    def check(name, out, ref, atol=1e-4, rtol=1e-4):
        global ok
        if not bool(jnp.allclose(out, ref, atol=atol, rtol=rtol)):
            ok = False
            print(f"MISMATCH {name}: max err {float(jnp.max(jnp.abs(out - ref)))}")

    # 1) Lane-dense kernel path: batch=2, seq=16, channels=128 (channel_dim=-1 and 1).
    B, T, C = 2, 16, 128
    x = jax.random.normal(k1, (B, T, C), jnp.float32)
    bias = jax.random.normal(k2, (C,), jnp.float32) * 0.1
    for cd, xin in ((-1, x), (1, jnp.moveaxis(x, -1, 1))):
        out = jax.block_until_ready(bias_norm(xin, bias, log_scale, channel_dim=cd))
        check(f"channel_dim={cd}", out, reference_bias_norm(xin, bias, log_scale, cd))

    # 2) Tiny-C fallback path (C=32, not a multiple of 128 -> plain XLA).
    xs = jax.random.normal(k3, (2, 16, 32), jnp.float32)
    bs = jax.random.normal(k4, (32,), jnp.float32) * 0.1
    out_s = jax.block_until_ready(bias_norm(xs, bs, log_scale))
    check("small-C fallback", out_s, reference_bias_norm(xs, bs, log_scale))

    # 3) Larger case: multi-step parallel grid with a partial last row tile.
    x_big = jax.random.normal(k5, (3, 300, 128), jnp.float32)   # N = 900 rows
    bias_big = jax.random.normal(k6, (128,), jnp.float32) * 0.1
    out_big = jax.block_until_ready(bias_norm(x_big, bias_big, log_scale))
    check("big", out_big, reference_bias_norm(x_big, bias_big, log_scale))

    # 4) bf16 input path (f32 variance accumulate, output multiply in bf16).
    x_bf = jax.random.normal(k1, (2, 64, 128), jnp.float32).astype(jnp.bfloat16)
    out_bf = jax.block_until_ready(bias_norm(x_bf, bias, log_scale))
    ref_bf = reference_bias_norm(x_bf.astype(jnp.float32), bias, log_scale)
    check("bf16", out_bf.astype(jnp.float32), ref_bf, atol=5e-2, rtol=5e-2)

    if ok:
        print("KERNEL_OK")
</pallas_src>

<mosaic_0001>
module attributes {stable_mosaic.version = 11 : i64} {
  func.func @_bias_norm_kernel(%arg0: i32, %arg1: memref<1xf32, #tpu.memory_space<smem>>, %arg2: memref<16x128xf32, #tpu.memory_space<vmem>>, %arg3: memref<1x128xf32, #tpu.memory_space<vmem>>, %arg4: memref<16x128xf32, #tpu.memory_space<vmem>>) attributes {dimension_semantics = [#tpu.dimension_semantics<parallel>], iteration_bounds = array<i64: 2>, scalar_prefetch = 0 : i64, scratch_operands = 0 : i64, tpu.core_type = #tpu.core_type<tc>, window_params = [{transform_indices = @transform_0, window_bounds = array<i64: 1>}, {transform_indices = @transform_1, window_bounds = array<i64: 16, 128>}, {pipeline_mode = #tpu.pipeline_mode<synchronous>, transform_indices = @transform_2, window_bounds = array<i64: 1, 128>}, {transform_indices = @transform_3, window_bounds = array<i64: 16, 128>}]} {
    %c0 = arith.constant 0 : index
    %c0_0 = arith.constant 0 : index
    %0 = vector.load %arg2[%c0, %c0_0] : memref<16x128xf32, #tpu.memory_space<vmem>>, vector<16x128xf32>
    %c0_1 = arith.constant 0 : index
    %c0_2 = arith.constant 0 : index
    %1 = vector.load %arg3[%c0_1, %c0_2] : memref<1x128xf32, #tpu.memory_space<vmem>>, vector<1x128xf32>
    %2 = vector.broadcast %1 : vector<1x128xf32> to vector<16x128xf32>
    %3 = arith.subf %0, %2 : vector<16x128xf32>
    %4 = arith.mulf %3, %3 : vector<16x128xf32>
    %cst = arith.constant dense<0.000000e+00> : vector<16xf32>
    %5 = vector.multi_reduction <add>, %4, %cst [1] : vector<16x128xf32> to vector<16xf32>
    %6 = vector.shape_cast %5 : vector<16xf32> to vector<16x1xf32>
    %c0_3 = arith.constant 0 : index
    %7 = memref.load %arg1[%c0_3] : memref<1xf32, #tpu.memory_space<smem>>
    %8 = vector.broadcast %7 : f32 to vector<16x1xf32>
    %9 = arith.mulf %6, %8 : vector<16x1xf32>
    %10 = math.rsqrt %9 : vector<16x1xf32>
    %11 = vector.broadcast %10 : vector<16x1xf32> to vector<16x128xf32>
    %12 = arith.mulf %0, %11 : vector<16x128xf32>
    %c0_4 = arith.constant 0 : index
    %c0_5 = arith.constant 0 : index
    %13 = vector.load %arg4[%c0_4, %c0_5] : memref<16x128xf32, #tpu.memory_space<vmem>>, vector<16x128xf32>
    tpu.vector_store %arg4[%c0_4, %c0_5], %12 {strides = array<i32>} : memref<16x128xf32, #tpu.memory_space<vmem>>, vector<16x128xf32>,
    return
  }
  func.func @transform_0(%arg0: i32) -> i32 {
    %c0_i32 = arith.constant 0 : i32
    %c0_i32_0 = arith.constant 0 : i32
    return %c0_i32 : i32
  }
  func.func @transform_1(%arg0: i32) -> (i32, i32) {
    %c0_i32 = arith.constant 0 : i32
    %c0_i32_0 = arith.constant 0 : i32
    return %arg0, %c0_i32 : i32, i32
  }
  func.func @transform_2(%arg0: i32) -> (i32, i32) {
    %c0_i32 = arith.constant 0 : i32
    %c0_i32_0 = arith.constant 0 : i32
    %c0_i32_1 = arith.constant 0 : i32
    return %c0_i32, %c0_i32_0 : i32, i32
  }
  func.func @transform_3(%arg0: i32) -> (i32, i32) {
    %c0_i32 = arith.constant 0 : i32
    %c0_i32_0 = arith.constant 0 : i32
    return %arg0, %c0_i32 : i32, i32
  }
}

</mosaic_0001>

<llo_original>
// kernel: tpu_custom_call.1
$region0: #{tpu_custom_call.1}
  #allocation0 [shape = 'u32[]', space=smem, size = 0x4, offset = 0x4, fixed_abs, tag = 'smem constant byte address 0x4 - core index']
  #allocation1 [shape = 'u32[144,128]{1,0:T(1,128)}', space=vmem, size = 0x12000, scoped, tag = 'internal scratch']
  #allocation2 [shape = 'f32[1]{0:T(128)S(6)}', space=smem, size = 0x200, scoped, tag = 'scoped memory for tpu_custom_call.1']
  %s0 = inlined_call_operand.<no memory space> [shape: f32[1], index: 0, kind: input, shape index: {}]
  %s1 = inlined_call_operand.hbm [shape: f32[32,128], index: 1, kind: input, shape index: {}]
  %s2 = inlined_call_operand.vmem [shape: f32[1,128], index: 2, kind: input, shape index: {}]
  %s3 = inlined_call_operand.hbm [shape: f32[32,128], index: 3, kind: output, shape index: {}]
  %s4 = sld [smem:[#allocation0]]
  $region49: #{tpu_custom_call.1} parent=0
    _
  %s6 = ssub.s32 1, %s4
  %s7 = scalar_select 0, %s6, %s4
  %8 = sst [smem:[#allocation2]] %s0
  $region1: #{tpu_custom_call.1} parent=0
    #allocation3 [shape = 'u8[16384]{0}', space=vmem, size = 0x4000, scoped, tag = 'input window, operand 1']
    #allocation4 [shape = 's32[2]{0}', space=sflag, size = 0x8, scoped, tag = 'scoped memory for tpu_custom_call.1']
    #allocation5 [shape = 's32[2]{0}', space=sflag, size = 0x8, scoped, tag = 'scoped memory for tpu_custom_call.1']
    #allocation6 [shape = 'u8[16384]{0}', space=vmem, size = 0x4000, scoped, tag = 'output window, operand 0']
    %9 = vsyncpa [#allocation4], 0
    %s10 = scalar_lea.sflag [#allocation4], 1
    %11 = vsyncpa %s10, 0
    %12 = vsyncpa [#allocation5], 0
    %s13 = scalar_lea.sflag [#allocation5], 1
    %14 = vsyncpa %s13, 0
    loop: start=0, step=1, limit=4
    $region2: #{tpu_custom_call.1} parent=1 // loop_pre_header
      _
    $region3: #{tpu_custom_call.1} parent=1 // loop_header
      %s16 = sphi 0, %s20
      %p17 = scmp.ge.s32.totalorder %s16, 4
      %s24 = sphi 0, %s24
      %s26 = sphi 0, %s24
      %s27 = sphi 0, %s26
      %s41 = sphi 0, %s27
      %s47 = sphi 0, %s49
      %s50 = sphi 0, %s47
      %s51 = sphi 0, %s50
      %s67 = sphi 0, %s51
      %s71 = sphi 0, %s71
      %s73 = sphi 0, %s71
      %s74 = sphi 0, %s73
      %s88 = sphi 0, %s74
      %s94 = sphi 0, %s96
      %s97 = sphi 0, %s94
      %s98 = sphi 0, %s97
      %s114 = sphi 0, %s98
    $region4: #{tpu_custom_call.1} parent=1 // loop_header_branch
      %19 = sbr.rel (%p17) target = $region8
    $region5: #{tpu_custom_call.1} parent=1 // loop_body
      %s21 = ssub.s32 %s16, 1
      %s22 = ssub.s32 %s16, 2
      %s23 = sadd.s32 %s16, 1
      %s25 = sadd.s32 %s24, 1
      %p28 = scmp.eq.s32.totalorder %s16, 1
      %p29 = scmp.ne.s32.totalorder %s24, %s26
      %p30 = scmp.eq.s32.totalorder %s16, 0
      %p31 = por %p29, %p30
      %p32 = scmp.ne.s32.totalorder %s24, %s26
      %p33 = scmp.eq.s32.totalorder %s21, 1
      %p34 = por %p32, %p33
      %p35 = scmp.ne.s32.totalorder %s26, %s27
      %p36 = scmp.eq.s32.totalorder %s21, 0
      %p37 = por %p35, %p36
      %p38 = scmp.ne.s32.totalorder %s26, %s27
      %p39 = scmp.eq.s32.totalorder %s22, 1
      %p40 = por %p38, %p39
      %p42 = scmp.ne.s32.totalorder %s27, %s41
      %p43 = scmp.eq.s32.totalorder %s22, 0
      %p44 = por %p42, %p43
      %s45 = ssub.s32 %s16, %s23
      %p46 = scmp.eq.s32.totalorder %s45, 0
      %s48 = sadd.s32 %s47, 1
      %s49 = scalar_select %p46, %s47, %s48
      %p52 = pneg %p46
      %p53 = scmp.eq.s32.totalorder %s16, 1
      %p54 = por %p52, %p53
      %p55 = scmp.ne.s32.totalorder %s47, %s50
      %p56 = scmp.eq.s32.totalorder %s16, 0
      %p57 = por %p55, %p56
      %p58 = scmp.ne.s32.totalorder %s47, %s50
      %p59 = scmp.eq.s32.totalorder %s21, 1
      %p60 = por %p58, %p59
      %p61 = scmp.ne.s32.totalorder %s50, %s51
      %p62 = scmp.eq.s32.totalorder %s21, 0
      %p63 = por %p61, %p62
      %p64 = scmp.ne.s32.totalorder %s50, %s51
      %p65 = scmp.eq.s32.totalorder %s22, 1
      %p66 = por %p64, %p65
      %p68 = scmp.ne.s32.totalorder %s51, %s67
      %p69 = scmp.eq.s32.totalorder %s22, 0
      %p70 = por %p68, %p69
      %s72 = sadd.s32 %s71, 1
      %p75 = scmp.eq.s32.totalorder %s16, 1
      %p76 = scmp.ne.s32.totalorder %s71, %s73
      %p77 = scmp.eq.s32.totalorder %s16, 0
      %p78 = por %p76, %p77
      %p79 = scmp.ne.s32.totalorder %s71, %s73
      %p80 = scmp.eq.s32.totalorder %s21, 1
      %p81 = por %p79, %p80
      %p82 = scmp.ne.s32.totalorder %s73, %s74
      %p83 = scmp.eq.s32.totalorder %s21, 0
      %p84 = por %p82, %p83
      %p85 = scmp.ne.s32.totalorder %s73, %s74
      %p86 = scmp.eq.s32.totalorder %s22, 1
      %p87 = por %p85, %p86
      %p89 = scmp.ne.s32.totalorder %s74, %s88
      %p90 = scmp.eq.s32.totalorder %s22, 0
      %p91 = por %p89, %p90
      %s92 = ssub.s32 %s16, %s23
      %p93 = scmp.eq.s32.totalorder %s92, 0
      %s95 = sadd.s32 %s94, 1
      %s96 = scalar_select %p93, %s94, %s95
      %p99 = pneg %p93
      %p100 = scmp.eq.s32.totalorder %s16, 1
      %p101 = por %p99, %p100
      %p102 = scmp.ne.s32.totalorder %s94, %s97
      %p103 = scmp.eq.s32.totalorder %s16, 0
      %p104 = por %p102, %p103
      %p105 = scmp.ne.s32.totalorder %s94, %s97
      %p106 = scmp.eq.s32.totalorder %s21, 1
      %p107 = por %p105, %p106
      %p108 = scmp.ne.s32.totalorder %s97, %s98
      %p109 = scmp.eq.s32.totalorder %s21, 0
      %p110 = por %p108, %p109
      %p111 = scmp.ne.s32.totalorder %s97, %s98
      %p112 = scmp.eq.s32.totalorder %s22, 1
      %p113 = por %p111, %p112
      %p115 = scmp.ne.s32.totalorder %s98, %s114
      %p116 = scmp.eq.s32.totalorder %s22, 0
      %p117 = por %p115, %p116
      %p118 = scmp.le.s32.totalorder 1, %s16
      %p119 = scmp.lt.s32.totalorder %s16, 3
      %p120 = pnand %p118, %p119
      %p121 = pneg %p120
      // Predicated region
      $region9: #{tpu_custom_call.1} parent=5 // pred_check
        _
      $region10: #{tpu_custom_call.1} parent=5 // pred_check_branch
        %123 = sbr.rel (%p120) target = $region12
      $region11: #{tpu_custom_call.1} parent=5 // pred_region
        %s124 = ssub.s32 %s16, 1
        // Predicated region
        $region13: #{tpu_custom_call.1} parent=11 // pred_check
          %p125 = pneg %p37
        $region14: #{tpu_custom_call.1} parent=11 // pred_check_branch
          %127 = sbr.rel (%p125) target = $region16
        $region15: #{tpu_custom_call.1} parent=11 // pred_region
          _
        $region16: #{tpu_custom_call.1} parent=11 // pred_fallthru
          _
        // Predicated region
        $region17: #{tpu_custom_call.1} parent=11 // pred_check
          %p128 = pneg %p84
        $region18: #{tpu_custom_call.1} parent=11 // pred_check_branch
          %130 = sbr.rel (%p128) target = $region20
        $region19: #{tpu_custom_call.1} parent=11 // pred_region
          _
        $region20: #{tpu_custom_call.1} parent=11 // pred_fallthru
          _
      $region12: #{tpu_custom_call.1} parent=5 // pred_fallthru
        _
      %p131 = scmp.lt.s32.totalorder %s16, 2
      // Predicated region
      $region21: #{tpu_custom_call.1} parent=5 // pred_check
        %p132 = pneg %p131
      $region22: #{tpu_custom_call.1} parent=5 // pred_check_branch
        %134 = sbr.rel (%p132) target = $region24
      $region23: #{tpu_custom_call.1} parent=5 // pred_region
        // Predicated region
        $region25: #{tpu_custom_call.1} parent=23 // pred_check
          %p135 = pneg %p57
        $region26: #{tpu_custom_call.1} parent=23 // pred_check_branch
          %137 = sbr.rel (%p135) target = $region28
        $region27: #{tpu_custom_call.1} parent=23 // pred_region
          %s138 = sand.u32 %s47, 1
          %s139 = scalar_lea.sflag [#allocation4], %s138
          %s140 = sand.u32 %s47, 1
          %s141 = smul.addr %s140, 16
          %s142 = scalar_lea.vmem [#allocation3], %s141
          %s143 = smul.u32 2, %s16
          %s145 = ssub.s32 256, 256
          %146 = vsyncadd %s139, %s145
          %s147 = smul.addr %s143, 128
          %s148 = scalar_lea.hbm %s1, %s147
          %s149 = sshll.u32 %s142, 4
          %s150 = int_to_ptr.vmem [resolvable:$true] %s149
          %155 = dma.hbm_to_vmem [thread:$0]  %s148, 256, %s150, %s139, 128, 128, 8
        $region28: #{tpu_custom_call.1} parent=23 // pred_fallthru
          _
      $region24: #{tpu_custom_call.1} parent=5 // pred_fallthru
        _
      %p156 = scmp.le.s32.totalorder 1, %s16
      %p157 = scmp.lt.s32.totalorder %s16, 3
      %p158 = pnand %p156, %p157
      %p159 = pneg %p158
      // Predicated region
      $region29: #{tpu_custom_call.1} parent=5 // pred_check
        _
      $region30: #{tpu_custom_call.1} parent=5 // pred_check_branch
        %161 = sbr.rel (%p158) target = $region32
      $region31: #{tpu_custom_call.1} parent=5 // pred_region
        %s162 = ssub.s32 %s16, 1
        %s163 = sand.u32 %s50, 1
        %s164 = scalar_lea.sflag [#allocation4], %s163
        %s165 = sand.u32 %s50, 1
        %s166 = smul.addr %s165, 16
        %s167 = scalar_lea.vmem [#allocation3], %s166
        // Predicated region
        $region33: #{tpu_custom_call.1} parent=31 // pred_check
          %p168 = pneg %p63
        $region34: #{tpu_custom_call.1} parent=31 // pred_check_branch
          %170 = sbr.rel (%p168) target = $region36
        $region35: #{tpu_custom_call.1} parent=31 // pred_region
          %171 = dma.done %s164, 256
        $region36: #{tpu_custom_call.1} parent=31 // pred_fallthru
          _
        %p172 = pneg %p37
        %p173 = pneg %p34
        %s174 = sand.u32 %s50, 1
        %s175 = scalar_lea.sflag [#allocation4], %s174
        %s176 = sand.u32 %s50, 1
        %s177 = smul.addr %s176, 16
        %s178 = scalar_lea.vmem [#allocation3], %s177
        %p179 = pneg %p63
        %p180 = pneg %p60
        %p181 = pneg %p84
        %p182 = pneg %p81
        %p183 = pneg %p110
        %p184 = pneg %p107
        %s185 = sand.u32 %s97, 1
        %s186 = scalar_lea.sflag [#allocation5], %s185
        %s187 = sand.u32 %s97, 1
        %s188 = smul.addr %s187, 16
        %s189 = scalar_lea.vmem [#allocation6], %s188
        %s190 = smul.u32 2, %s21
        %s191 = smul.u32 2, %s21
        %v192 = vld [vmem:[%s167] sm:$0xff]
        %v193 = vld [vmem:[%s167 + $0x8] sm:$0xff]
        %v194 = vld [vmem:[%s2] sm:$0x1]
        %v196 = vlaneseq
        %v197 = vshrl.u32 %v196, 7
        %v198 = vsub.s32 0, %v197
        %v199 = vrot.slane %v194, %v198
        %v201 = vsub.f32 %v192, %v199
        %v202 = vsub.f32 %v193, %v199
        %v203 = vmul.f32 %v201, %v201
        %v204 = vmul.f32 %v202, %v202
        %205 = vadd.xlane.f32.xlu0 %v203
        %v206 = vpop.xlane.xlu0 %205
        %207 = vadd.xlane.f32.xlu0 %v204
        %v208 = vpop.xlane.xlu0 %207
        %s209 = sld [smem:[#allocation2]]
        %v210 = vstv %s209
        %v211 = vmul.f32 %v206, %v210
        %v212 = vmul.f32 %v208, %v210
        %v213 = vrsqrt.pop %v211
        %v214 = vrsqrt.pop %v212
        %v215 = vmul.f32 %v192, %v213
        %v216 = vmul.f32 %v193, %v214
        %217 = vst [vmem:[%s189] sm:$0xff] %v215
        %218 = vst [vmem:[%s189 + $0x8] sm:$0xff] %v216
        %s219 = sand.u32 %s97, 1
        %s220 = scalar_lea.sflag [#allocation5], %s219
        %s221 = sand.u32 %s97, 1
        %s222 = smul.addr %s221, 16
        %s223 = scalar_lea.vmem [#allocation6], %s222
        // Predicated region
        $region37: #{tpu_custom_call.1} parent=31 // pred_check
          %p224 = pneg %p107
        $region38: #{tpu_custom_call.1} parent=31 // pred_check_branch
          %226 = sbr.rel (%p224) target = $region40
        $region39: #{tpu_custom_call.1} parent=31 // pred_region
          %s227 = smul.u32 2, %s21
          %s229 = ssub.s32 256, 256
          %230 = vsyncadd %s220, %s229
          %s231 = smul.addr %s227, 128
          %s232 = scalar_lea.hbm %s3, %s231
          %s233 = sshll.u32 %s223, 4
          %s234 = int_to_ptr.vmem [resolvable:$true] %s233
          %239 = dma.vmem_to_hbm [thread:$0]  %s234, 256, %s232, %s220, 128, 128, 8
        $region40: #{tpu_custom_call.1} parent=31 // pred_fallthru
          _
      $region32: #{tpu_custom_call.1} parent=5 // pred_fallthru
        _
      %p240 = scmp.le.s32.totalorder 2, %s16
      // Predicated region
      $region41: #{tpu_custom_call.1} parent=5 // pred_check
        %p241 = pneg %p240
      $region42: #{tpu_custom_call.1} parent=5 // pred_check_branch
        %243 = sbr.rel (%p241) target = $region44
      $region43: #{tpu_custom_call.1} parent=5 // pred_region
        %s244 = ssub.s32 %s16, 2
        // Predicated region
        $region45: #{tpu_custom_call.1} parent=43 // pred_check
          %p245 = pneg %p113
        $region46: #{tpu_custom_call.1} parent=43 // pred_check_branch
          %247 = sbr.rel (%p245) target = $region48
        $region47: #{tpu_custom_call.1} parent=43 // pred_region
          %s248 = sand.u32 %s98, 1
          %s249 = scalar_lea.sflag [#allocation5], %s248
          %s250 = sand.u32 %s98, 1
          %s251 = smul.addr %s250, 16
          %s252 = scalar_lea.vmem [#allocation6], %s251
          %253 = dma.done %s249, 256
        $region48: #{tpu_custom_call.1} parent=43 // pred_fallthru
          _
      $region44: #{tpu_custom_call.1} parent=5 // pred_fallthru
        _
    $region6: #{tpu_custom_call.1} parent=1 // loop_footer
      %s20 = sadd.s32 1, %s16
    $region7: #{tpu_custom_call.1} parent=1 // loop_footer_branch
      %15 = sbr.rel target = $region3
    $region8: #{tpu_custom_call.1} parent=1 // loop_exit
      _
    %254 = vsyncpa [#allocation4], 1
    %s255 = scalar_lea.sflag [#allocation4], 1
    %256 = vsyncpa %s255, 1
    %257 = vsyncpa [#allocation5], 1
    %s258 = scalar_lea.sflag [#allocation5], 1
    %259 = vsyncpa %s258, 1

</llo_original>
